<compile_context>
chip_gen: v5e
topology: v5e:2x2
jax: 0.10.0
libtpu: 0.0.40
codegen_flags: <defaults>
</compile_context>

<pallas_src>
import jax
import jax.numpy as jnp
from jax.experimental import pallas as pl
from jax.experimental.pallas import tpu as pltpu


def _round_up(x, m):
    return (x + m - 1) // m * m


def _freblock_kernel(xp_ref, w1_ref, b1_ref, w2_ref, b2_ref, out_ref, y1p_ref):
    # xp_ref : (H+2, Lt) VMEM  input, H padded by 1 row each side (conv1 pad)
    # w1_ref : (3,   Lt) VMEM  per-lane conv1 taps
    # b1_ref : (1,   Lt) VMEM  per-lane conv1 bias
    # w2_ref : (7,   Lt) VMEM  per-lane conv2 taps
    # b2_ref : (1,   Lt) VMEM  per-lane conv2 bias
    # out_ref: (H,   Lt) VMEM
    # y1p_ref: (Hs,  Lt) VMEM scratch, Hs = round_up(H+6, 8); holds the
    #          zero-padded conv1 output (3-row zero halo top/bottom).
    H = out_ref.shape[0]
    Lt = out_ref.shape[1]
    Hs = y1p_ref.shape[0]

    xp = xp_ref[...]  # (H+2, Lt)

    # conv1: 3 taps along sublanes, bias folded into the first FMA.
    y1 = w1_ref[0:1, :] * xp[0:H, :] + b1_ref[...]
    for t in range(1, 3):
        y1 = y1 + w1_ref[t:t + 1, :] * xp[t:t + H, :]

    # LeakyReLU(0.1)
    y1 = jnp.where(y1 >= 0, y1, 0.1 * y1)

    # Stage zero-padded conv1 output in an aligned scratch: PyTorch's conv2
    # zero-pads the conv1 *output*, so the 3-row halo must be exactly zero.
    zeros_top = jnp.zeros((3, Lt), jnp.float32)
    zeros_bot = jnp.zeros((Hs - H - 3, Lt), jnp.float32)
    y1p_ref[...] = jnp.concatenate([zeros_top, y1, zeros_bot], axis=0)

    # conv2: 7 taps along sublanes, bias folded into the first FMA.
    y2 = w2_ref[0:1, :] * y1p_ref[0:H, :] + b2_ref[...]
    for t in range(1, 7):
        y2 = y2 + w2_ref[t:t + 1, :] * y1p_ref[t:t + H, :]

    out_ref[...] = y2


def _lane_expand_taps(w_real, w_imag, B, C, W, L_pad):
    """(C, T) real/imag taps -> (T, L_pad) per-lane taps (lane order 2,B,C,W)."""
    T = w_real.shape[1]
    w = jnp.stack([w_real, w_imag], axis=0)            # (2, C, T)
    w = jnp.transpose(w, (2, 0, 1))                    # (T, 2, C)
    w = jnp.broadcast_to(w[:, :, None, :, None], (T, 2, B, C, W))
    w = w.reshape(T, 2 * B * C * W).astype(jnp.float32)
    return jnp.pad(w, ((0, 0), (0, L_pad - 2 * B * C * W)))


def _lane_expand_bias(b_real, b_imag, B, C, W, L_pad):
    """(C,) real/imag biases -> (1, L_pad) per-lane bias."""
    b = jnp.stack([b_real, b_imag], axis=0)            # (2, C)
    b = jnp.broadcast_to(b[None, :, None, :, None], (1, 2, B, C, W))
    b = b.reshape(1, 2 * B * C * W).astype(jnp.float32)
    return jnp.pad(b, ((0, 0), (0, L_pad - 2 * B * C * W)))


def fre_block_spa(x_complex, params):
    """FreBlockSpa forward. x_complex: (B, C, H, W) complex64.
    params: {"real": (w1 (C,3), b1 (C,), w2 (C,7), b2 (C,)), "imag": (...)}.
    """
    B, C, H, W = x_complex.shape
    L = 2 * B * C * W

    # Lane tile: >=128 lanes, capped so one (H+8, Lt) f32 block stays ~2 MiB.
    lane_budget = max(128, min(2048, _round_up(L, 128)))
    max_by_vmem = max(128, ((2 * 1024 * 1024) // (4 * (H + 8))) // 128 * 128)
    L_TILE = min(lane_budget, max_by_vmem)
    L_pad = _round_up(L, L_TILE)
    n_tiles = L_pad // L_TILE
    Hs = _round_up(H + 6, 8)

    # Pack real & imag branches + batch + channel + W onto the lane axis.
    xr = jnp.real(x_complex).astype(jnp.float32)
    xi = jnp.imag(x_complex).astype(jnp.float32)
    xs = jnp.stack([xr, xi], axis=0)                   # (2, B, C, H, W)
    xs = jnp.transpose(xs, (3, 0, 1, 2, 4))            # (H, 2, B, C, W)
    xs = xs.reshape(H, L)
    xp = jnp.pad(xs, ((1, 1), (0, L_pad - L)))         # (H+2, L_pad)

    w1r, b1r, w2r, b2r = params["real"]
    w1i, b1i, w2i, b2i = params["imag"]
    w1l = _lane_expand_taps(w1r, w1i, B, C, W, L_pad)  # (3, L_pad)
    b1l = _lane_expand_bias(b1r, b1i, B, C, W, L_pad)  # (1, L_pad)
    w2l = _lane_expand_taps(w2r, w2i, B, C, W, L_pad)  # (7, L_pad)
    b2l = _lane_expand_bias(b2r, b2i, B, C, W, L_pad)  # (1, L_pad)

    out2d = pl.pallas_call(
        _freblock_kernel,
        out_shape=jax.ShapeDtypeStruct((H, L_pad), jnp.float32),
        grid_spec=pltpu.PrefetchScalarGridSpec(
            num_scalar_prefetch=0,
            grid=(n_tiles,),
            in_specs=[
                pl.BlockSpec((H + 2, L_TILE), lambda j: (0, j)),
                pl.BlockSpec((3, L_TILE), lambda j: (0, j)),
                pl.BlockSpec((1, L_TILE), lambda j: (0, j)),
                pl.BlockSpec((7, L_TILE), lambda j: (0, j)),
                pl.BlockSpec((1, L_TILE), lambda j: (0, j)),
            ],
            out_specs=pl.BlockSpec((H, L_TILE), lambda j: (0, j)),
            scratch_shapes=[pltpu.VMEM((Hs, L_TILE), jnp.float32)],
        ),
        compiler_params=pltpu.CompilerParams(
            dimension_semantics=("parallel",)),
    )(xp, w1l, b1l, w2l, b2l)

    out = out2d[:, :L].reshape(H, 2, B, C, W)
    out = jnp.transpose(out, (1, 2, 3, 0, 4))          # (2, B, C, H, W)
    return jax.lax.complex(out[0], out[1])


# ---------------- pure-JAX reference (for correctness check) ----------------
def _ref_branch(x, w1, b1, w2, b2):
    B, C, H, W = x.shape
    xp = jnp.pad(x, ((0, 0), (0, 0), (1, 1), (0, 0)))
    y = sum(w1[None, :, t, None, None] * xp[:, :, t:t + H, :] for t in range(3))
    y = y + b1[None, :, None, None]
    y = jnp.where(y >= 0, y, 0.1 * y)
    yp = jnp.pad(y, ((0, 0), (0, 0), (3, 3), (0, 0)))
    z = sum(w2[None, :, t, None, None] * yp[:, :, t:t + H, :] for t in range(7))
    z = z + b2[None, :, None, None]
    return z


def _init_params(key, C):
    ks = jax.random.split(key, 8)

    def mk(i, shape, scale):
        return (scale * jax.random.normal(ks[i], shape)).astype(jnp.float32)

    real = (mk(0, (C, 3), 0.5), mk(1, (C,), 0.1),
            mk(2, (C, 7), 0.3), mk(3, (C,), 0.1))
    imag = (mk(4, (C, 3), 0.5), mk(5, (C,), 0.1),
            mk(6, (C, 7), 0.3), mk(7, (C,), 0.1))
    return {"real": real, "imag": imag}


if __name__ == "__main__":
    B, C, H, W = 2, 4, 16, 16
    key = jax.random.PRNGKey(0)
    k_in_r, k_in_i, k_p = jax.random.split(key, 3)

    x_real = jax.random.normal(k_in_r, (B, C, H, W), dtype=jnp.float32)
    x_imag = jax.random.normal(k_in_i, (B, C, H, W), dtype=jnp.float32)
    x = jax.lax.complex(x_real, x_imag)

    params = _init_params(k_p, C)

    out = fre_block_spa(x, params)
    out = jax.block_until_ready(out)

    # reference check
    ref_r = _ref_branch(x_real, *params["real"])
    ref_i = _ref_branch(x_imag, *params["imag"])
    ref = jax.lax.complex(ref_r, ref_i)

    assert out.shape == (B, C, H, W) and out.dtype == jnp.complex64
    assert jnp.allclose(out, ref, atol=1e-5, rtol=1e-5)

    print("KERNEL_OK")
</pallas_src>

<mosaic_0001>
module attributes {stable_mosaic.version = 11 : i64} {
  func.func @_freblock_kernel(%arg0: i32, %arg1: memref<18x256xf32, #tpu.memory_space<vmem>>, %arg2: memref<3x256xf32, #tpu.memory_space<vmem>>, %arg3: memref<1x256xf32, #tpu.memory_space<vmem>>, %arg4: memref<7x256xf32, #tpu.memory_space<vmem>>, %arg5: memref<1x256xf32, #tpu.memory_space<vmem>>, %arg6: memref<16x256xf32, #tpu.memory_space<vmem>>, %arg7: memref<24x256xf32, #tpu.memory_space<vmem>>) attributes {dimension_semantics = [#tpu.dimension_semantics<parallel>], iteration_bounds = array<i64: 1>, scalar_prefetch = 0 : i64, scratch_operands = 1 : i64, tpu.core_type = #tpu.core_type<tc>, window_params = [{transform_indices = @transform_0, window_bounds = array<i64: 18, 256>}, {transform_indices = @transform_1, window_bounds = array<i64: 3, 256>}, {transform_indices = @transform_2, window_bounds = array<i64: 1, 256>}, {transform_indices = @transform_3, window_bounds = array<i64: 7, 256>}, {transform_indices = @transform_4, window_bounds = array<i64: 1, 256>}, {transform_indices = @transform_5, window_bounds = array<i64: 16, 256>}]} {
    %c0 = arith.constant 0 : index
    %c0_0 = arith.constant 0 : index
    %0 = vector.load %arg1[%c0, %c0_0] : memref<18x256xf32, #tpu.memory_space<vmem>>, vector<18x256xf32>
    %c0_1 = arith.constant 0 : index
    %c0_2 = arith.constant 0 : index
    %1 = vector.load %arg2[%c0_1, %c0_2] : memref<3x256xf32, #tpu.memory_space<vmem>>, vector<1x256xf32>
    %2 = vector.extract_strided_slice %0 {offsets = [0, 0], sizes = [16, 256], strides = [1, 1]} : vector<18x256xf32> to vector<16x256xf32>
    %3 = vector.broadcast %1 : vector<1x256xf32> to vector<16x256xf32>
    %4 = arith.mulf %3, %2 : vector<16x256xf32>
    %c0_3 = arith.constant 0 : index
    %c0_4 = arith.constant 0 : index
    %5 = vector.load %arg3[%c0_3, %c0_4] : memref<1x256xf32, #tpu.memory_space<vmem>>, vector<1x256xf32>
    %6 = vector.broadcast %5 : vector<1x256xf32> to vector<16x256xf32>
    %7 = arith.addf %4, %6 : vector<16x256xf32>
    %c1 = arith.constant 1 : index
    %c0_5 = arith.constant 0 : index
    %8 = vector.load %arg2[%c1, %c0_5] : memref<3x256xf32, #tpu.memory_space<vmem>>, vector<1x256xf32>
    %9 = vector.extract_strided_slice %0 {offsets = [1, 0], sizes = [16, 256], strides = [1, 1]} : vector<18x256xf32> to vector<16x256xf32>
    %10 = vector.broadcast %8 : vector<1x256xf32> to vector<16x256xf32>
    %11 = arith.mulf %10, %9 : vector<16x256xf32>
    %12 = arith.addf %7, %11 : vector<16x256xf32>
    %c2 = arith.constant 2 : index
    %c0_6 = arith.constant 0 : index
    %13 = vector.load %arg2[%c2, %c0_6] : memref<3x256xf32, #tpu.memory_space<vmem>>, vector<1x256xf32>
    %14 = vector.extract_strided_slice %0 {offsets = [2, 0], sizes = [16, 256], strides = [1, 1]} : vector<18x256xf32> to vector<16x256xf32>
    %15 = vector.broadcast %13 : vector<1x256xf32> to vector<16x256xf32>
    %16 = arith.mulf %15, %14 : vector<16x256xf32>
    %17 = arith.addf %12, %16 : vector<16x256xf32>
    %cst = arith.constant 0.000000e+00 : f32
    %18 = vector.broadcast %cst : f32 to vector<16x256xf32>
    %19 = arith.cmpf oge, %17, %18 : vector<16x256xf32>
    %cst_7 = arith.constant 1.000000e-01 : f32
    %20 = vector.broadcast %cst_7 : f32 to vector<16x256xf32>
    %21 = arith.mulf %20, %17 : vector<16x256xf32>
    %22 = arith.select %19, %17, %21 : vector<16x256xi1>, vector<16x256xf32>
    %cst_8 = arith.constant 0.000000e+00 : f32
    %23 = vector.broadcast %cst_8 : f32 to vector<3x256xf32>
    %cst_9 = arith.constant 0.000000e+00 : f32
    %24 = vector.broadcast %cst_9 : f32 to vector<5x256xf32>
    %25 = tpu.concatenate %23, %22, %24 in 0 : vector<3x256xf32>, vector<16x256xf32>, vector<5x256xf32> -> vector<24x256xf32>
    %c0_10 = arith.constant 0 : index
    %c0_11 = arith.constant 0 : index
    %26 = vector.load %arg7[%c0_10, %c0_11] : memref<24x256xf32, #tpu.memory_space<vmem>>, vector<24x256xf32>
    tpu.vector_store %arg7[%c0_10, %c0_11], %25 {strides = array<i32>} : memref<24x256xf32, #tpu.memory_space<vmem>>, vector<24x256xf32>,
    %c0_12 = arith.constant 0 : index
    %c0_13 = arith.constant 0 : index
    %27 = vector.load %arg4[%c0_12, %c0_13] : memref<7x256xf32, #tpu.memory_space<vmem>>, vector<1x256xf32>
    %c0_14 = arith.constant 0 : index
    %c0_15 = arith.constant 0 : index
    %28 = vector.load %arg7[%c0_14, %c0_15] : memref<24x256xf32, #tpu.memory_space<vmem>>, vector<16x256xf32>
    %29 = vector.broadcast %27 : vector<1x256xf32> to vector<16x256xf32>
    %30 = arith.mulf %29, %28 : vector<16x256xf32>
    %c0_16 = arith.constant 0 : index
    %c0_17 = arith.constant 0 : index
    %31 = vector.load %arg5[%c0_16, %c0_17] : memref<1x256xf32, #tpu.memory_space<vmem>>, vector<1x256xf32>
    %32 = vector.broadcast %31 : vector<1x256xf32> to vector<16x256xf32>
    %33 = arith.addf %30, %32 : vector<16x256xf32>
    %c1_18 = arith.constant 1 : index
    %c0_19 = arith.constant 0 : index
    %34 = vector.load %arg4[%c1_18, %c0_19] : memref<7x256xf32, #tpu.memory_space<vmem>>, vector<1x256xf32>
    %c1_20 = arith.constant 1 : index
    %c0_21 = arith.constant 0 : index
    %35 = vector.load %arg7[%c1_20, %c0_21] : memref<24x256xf32, #tpu.memory_space<vmem>>, vector<16x256xf32>
    %36 = vector.broadcast %34 : vector<1x256xf32> to vector<16x256xf32>
    %37 = arith.mulf %36, %35 : vector<16x256xf32>
    %38 = arith.addf %33, %37 : vector<16x256xf32>
    %c2_22 = arith.constant 2 : index
    %c0_23 = arith.constant 0 : index
    %39 = vector.load %arg4[%c2_22, %c0_23] : memref<7x256xf32, #tpu.memory_space<vmem>>, vector<1x256xf32>
    %c2_24 = arith.constant 2 : index
    %c0_25 = arith.constant 0 : index
    %40 = vector.load %arg7[%c2_24, %c0_25] : memref<24x256xf32, #tpu.memory_space<vmem>>, vector<16x256xf32>
    %41 = vector.broadcast %39 : vector<1x256xf32> to vector<16x256xf32>
    %42 = arith.mulf %41, %40 : vector<16x256xf32>
    %43 = arith.addf %38, %42 : vector<16x256xf32>
    %c3 = arith.constant 3 : index
    %c0_26 = arith.constant 0 : index
    %44 = vector.load %arg4[%c3, %c0_26] : memref<7x256xf32, #tpu.memory_space<vmem>>, vector<1x256xf32>
    %c3_27 = arith.constant 3 : index
    %c0_28 = arith.constant 0 : index
    %45 = vector.load %arg7[%c3_27, %c0_28] : memref<24x256xf32, #tpu.memory_space<vmem>>, vector<16x256xf32>
    %46 = vector.broadcast %44 : vector<1x256xf32> to vector<16x256xf32>
    %47 = arith.mulf %46, %45 : vector<16x256xf32>
    %48 = arith.addf %43, %47 : vector<16x256xf32>
    %c4 = arith.constant 4 : index
    %c0_29 = arith.constant 0 : index
    %49 = vector.load %arg4[%c4, %c0_29] : memref<7x256xf32, #tpu.memory_space<vmem>>, vector<1x256xf32>
    %c4_30 = arith.constant 4 : index
    %c0_31 = arith.constant 0 : index
    %50 = vector.load %arg7[%c4_30, %c0_31] : memref<24x256xf32, #tpu.memory_space<vmem>>, vector<16x256xf32>
    %51 = vector.broadcast %49 : vector<1x256xf32> to vector<16x256xf32>
    %52 = arith.mulf %51, %50 : vector<16x256xf32>
    %53 = arith.addf %48, %52 : vector<16x256xf32>
    %c5 = arith.constant 5 : index
    %c0_32 = arith.constant 0 : index
    %54 = vector.load %arg4[%c5, %c0_32] : memref<7x256xf32, #tpu.memory_space<vmem>>, vector<1x256xf32>
    %c5_33 = arith.constant 5 : index
    %c0_34 = arith.constant 0 : index
    %55 = vector.load %arg7[%c5_33, %c0_34] : memref<24x256xf32, #tpu.memory_space<vmem>>, vector<16x256xf32>
    %56 = vector.broadcast %54 : vector<1x256xf32> to vector<16x256xf32>
    %57 = arith.mulf %56, %55 : vector<16x256xf32>
    %58 = arith.addf %53, %57 : vector<16x256xf32>
    %c6 = arith.constant 6 : index
    %c0_35 = arith.constant 0 : index
    %59 = vector.load %arg4[%c6, %c0_35] : memref<7x256xf32, #tpu.memory_space<vmem>>, vector<1x256xf32>
    %c6_36 = arith.constant 6 : index
    %c0_37 = arith.constant 0 : index
    %60 = vector.load %arg7[%c6_36, %c0_37] : memref<24x256xf32, #tpu.memory_space<vmem>>, vector<16x256xf32>
    %61 = vector.broadcast %59 : vector<1x256xf32> to vector<16x256xf32>
    %62 = arith.mulf %61, %60 : vector<16x256xf32>
    %63 = arith.addf %58, %62 : vector<16x256xf32>
    %c0_38 = arith.constant 0 : index
    %c0_39 = arith.constant 0 : index
    %64 = vector.load %arg6[%c0_38, %c0_39] : memref<16x256xf32, #tpu.memory_space<vmem>>, vector<16x256xf32>
    tpu.vector_store %arg6[%c0_38, %c0_39], %63 {strides = array<i32>} : memref<16x256xf32, #tpu.memory_space<vmem>>, vector<16x256xf32>,
    return
  }
  func.func @transform_0(%arg0: i32) -> (i32, i32) {
    %c0_i32 = arith.constant 0 : i32
    %c0_i32_0 = arith.constant 0 : i32
    return %c0_i32, %arg0 : i32, i32
  }
  func.func @transform_1(%arg0: i32) -> (i32, i32) {
    %c0_i32 = arith.constant 0 : i32
    %c0_i32_0 = arith.constant 0 : i32
    return %c0_i32, %arg0 : i32, i32
  }
  func.func @transform_2(%arg0: i32) -> (i32, i32) {
    %c0_i32 = arith.constant 0 : i32
    %c0_i32_0 = arith.constant 0 : i32
    return %c0_i32, %arg0 : i32, i32
  }
  func.func @transform_3(%arg0: i32) -> (i32, i32) {
    %c0_i32 = arith.constant 0 : i32
    %c0_i32_0 = arith.constant 0 : i32
    return %c0_i32, %arg0 : i32, i32
  }
  func.func @transform_4(%arg0: i32) -> (i32, i32) {
    %c0_i32 = arith.constant 0 : i32
    %c0_i32_0 = arith.constant 0 : i32
    return %c0_i32, %arg0 : i32, i32
  }
  func.func @transform_5(%arg0: i32) -> (i32, i32) {
    %c0_i32 = arith.constant 0 : i32
    %c0_i32_0 = arith.constant 0 : i32
    return %c0_i32, %arg0 : i32, i32
  }
}

</mosaic_0001>

<llo_original>
// kernel: tpu_custom_call.1
$region0: #{tpu_custom_call.1}
  #allocation0 [shape = 'u32[]', space=smem, size = 0x4, offset = 0x4, fixed_abs, tag = 'smem constant byte address 0x4 - core index']
  #allocation1 [shape = 'u32[72,128]{1,0:T(1,128)}', space=vmem, size = 0x9000, scoped, tag = 'internal scratch']
  #allocation2 [shape = 'f32[24,256]{1,0:T(8,128)}', space=vmem, size = 0x6000, scoped, tag = 'scratch operand']
  %s0 = inlined_call_operand.hbm [shape: f32[18,256], index: 0, kind: input, shape index: {}]
  %s1 = inlined_call_operand.hbm [shape: f32[3,256], index: 1, kind: input, shape index: {}]
  %s2 = inlined_call_operand.hbm [shape: f32[1,256], index: 2, kind: input, shape index: {}]
  %s3 = inlined_call_operand.hbm [shape: f32[7,256], index: 3, kind: input, shape index: {}]
  %s4 = inlined_call_operand.vmem [shape: f32[1,256], index: 4, kind: input, shape index: {}]
  %s5 = inlined_call_operand.hbm [shape: f32[16,256], index: 5, kind: output, shape index: {}]
  %s6 = sld [smem:[#allocation0]]
  $region46: #{tpu_custom_call.1} parent=0
    _
  %s8 = ssub.s32 1, %s6
  %s9 = scalar_select 0, %s8, %s6
  $region1: #{tpu_custom_call.1} parent=0
    #allocation3 [shape = 'u8[24576]{0}', space=vmem, size = 0x6000, scoped, tag = 'input window, operand 0, single buffered']
    #allocation4 [shape = 's32[1]{0}', space=sflag, size = 0x4, scoped, tag = 'scoped memory for tpu_custom_call.1']
    #allocation5 [shape = 's32[1]{0}', space=sflag, size = 0x4, scoped, tag = 'scoped memory for tpu_custom_call.1']
    #allocation6 [shape = 'u8[4096]{0}', space=vmem, size = 0x1000, scoped, tag = 'input window, operand 1, single buffered']
    #allocation7 [shape = 's32[1]{0}', space=sflag, size = 0x4, scoped, tag = 'scoped memory for tpu_custom_call.1']
    #allocation8 [shape = 'u8[1024]{0}', space=vmem, size = 0x400, scoped, tag = 'input window, operand 2, single buffered']
    #allocation9 [shape = 'u8[8192]{0}', space=vmem, size = 0x2000, scoped, tag = 'input window, operand 3, single buffered']
    #allocation10 [shape = 's32[1]{0}', space=sflag, size = 0x4, scoped, tag = 'scoped memory for tpu_custom_call.1']
    #allocation11 [shape = 'u8[16384]{0}', space=vmem, size = 0x4000, scoped, tag = 'output window, operand 0, single buffered']
    %10 = vsyncpa [#allocation4], 0
    %11 = vsyncpa [#allocation7], 0
    %12 = vsyncpa [#allocation10], 0
    %13 = vsyncpa [#allocation5], 0
    // Predicated region
    $region2: #{tpu_custom_call.1} parent=1 // pred_check
      _
    $region3: #{tpu_custom_call.1} parent=1 // pred_check_branch
      %15 = sbr.rel (0) target = $region5
    $region4: #{tpu_custom_call.1} parent=1 // pred_region
      %17 = vsyncadd [#allocation4], 0
      %s18 = sshll.u32 %s0, 4
      %s19 = int_to_ptr.hbm [resolvable:$true] %s18
      %s20 = sshll.u32 [#allocation3], 4
      %s21 = int_to_ptr.vmem [resolvable:$true] %s20
      %26 = dma.hbm_to_vmem [thread:$0]  %s19, 768, %s21, [#allocation4], 256, 256, 16
    $region5: #{tpu_custom_call.1} parent=1 // pred_fallthru
      _
    // Predicated region
    $region6: #{tpu_custom_call.1} parent=1 // pred_check
      _
    $region7: #{tpu_custom_call.1} parent=1 // pred_check_branch
      %28 = sbr.rel (0) target = $region9
    $region8: #{tpu_custom_call.1} parent=1 // pred_region
      %30 = vsyncadd [#allocation7], 0
      %s32 = sshll.u32 %s1, 4
      %s33 = int_to_ptr.hbm [resolvable:$true] %s32
      %s34 = sshll.u32 [#allocation6], 4
      %s35 = int_to_ptr.vmem [resolvable:$true] %s34
      %37 = dma.hbm_to_vmem [thread:$0]  %s33, 128, %s35, [#allocation7]
    $region9: #{tpu_custom_call.1} parent=1 // pred_fallthru
      _
    // Predicated region
    $region10: #{tpu_custom_call.1} parent=1 // pred_check
      _
    $region11: #{tpu_custom_call.1} parent=1 // pred_check_branch
      %39 = sbr.rel (0) target = $region13
    $region12: #{tpu_custom_call.1} parent=1 // pred_region
      %41 = vsyncadd [#allocation7], 0
      %s43 = sshll.u32 %s2, 4
      %s44 = int_to_ptr.hbm [resolvable:$true] %s43
      %s45 = sshll.u32 [#allocation8], 4
      %s46 = int_to_ptr.vmem [resolvable:$true] %s45
      %48 = dma.hbm_to_vmem [thread:$0]  %s44, 32, %s46, [#allocation7]
    $region13: #{tpu_custom_call.1} parent=1 // pred_fallthru
      _
    // Predicated region
    $region14: #{tpu_custom_call.1} parent=1 // pred_check
      _
    $region15: #{tpu_custom_call.1} parent=1 // pred_check_branch
      %50 = sbr.rel (0) target = $region17
    $region16: #{tpu_custom_call.1} parent=1 // pred_region
      %52 = vsyncadd [#allocation10], 0
      %s54 = sshll.u32 %s3, 4
      %s55 = int_to_ptr.hbm [resolvable:$true] %s54
      %s56 = sshll.u32 [#allocation9], 4
      %s57 = int_to_ptr.vmem [resolvable:$true] %s56
      %59 = dma.hbm_to_vmem [thread:$0]  %s55, 256, %s57, [#allocation10]
    $region17: #{tpu_custom_call.1} parent=1 // pred_fallthru
      _
    // Predicated region
    $region18: #{tpu_custom_call.1} parent=1 // pred_check
      _
    $region19: #{tpu_custom_call.1} parent=1 // pred_check_branch
      %61 = sbr.rel (0) target = $region21
    $region20: #{tpu_custom_call.1} parent=1 // pred_region
      _
    $region21: #{tpu_custom_call.1} parent=1 // pred_fallthru
      _
    // Predicated region
    $region22: #{tpu_custom_call.1} parent=1 // pred_check
      _
    $region23: #{tpu_custom_call.1} parent=1 // pred_check_branch
      %63 = sbr.rel (0) target = $region25
    $region24: #{tpu_custom_call.1} parent=1 // pred_region
      %65 = dma.done [#allocation4], 768
    $region25: #{tpu_custom_call.1} parent=1 // pred_fallthru
      _
    // Predicated region
    $region26: #{tpu_custom_call.1} parent=1 // pred_check
      _
    $region27: #{tpu_custom_call.1} parent=1 // pred_check_branch
      %67 = sbr.rel (0) target = $region29
    $region28: #{tpu_custom_call.1} parent=1 // pred_region
      %69 = dma.done [#allocation7], 128
    $region29: #{tpu_custom_call.1} parent=1 // pred_fallthru
      _
    // Predicated region
    $region30: #{tpu_custom_call.1} parent=1 // pred_check
      _
    $region31: #{tpu_custom_call.1} parent=1 // pred_check_branch
      %71 = sbr.rel (0) target = $region33
    $region32: #{tpu_custom_call.1} parent=1 // pred_region
      %73 = dma.done [#allocation7], 32
    $region33: #{tpu_custom_call.1} parent=1 // pred_fallthru
      _
    // Predicated region
    $region34: #{tpu_custom_call.1} parent=1 // pred_check
      _
    $region35: #{tpu_custom_call.1} parent=1 // pred_check_branch
      %75 = sbr.rel (0) target = $region37
    $region36: #{tpu_custom_call.1} parent=1 // pred_region
      %77 = dma.done [#allocation10], 256
    $region37: #{tpu_custom_call.1} parent=1 // pred_fallthru
      _
    %v78 = vld [vmem:[#allocation3] sm:$0xff]
    %v79 = vld [vmem:[#allocation3 + $0x8] sm:$0xff]
    %v80 = vld [vmem:[#allocation3 + $0x10] sm:$0xff]
    %v81 = vld [vmem:[#allocation3 + $0x18] sm:$0xff]
    %v82 = vld [vmem:[#allocation3 + $0x20] sm:$0x3]
    %v83 = vld [vmem:[#allocation3 + $0x28] sm:$0x3]
    %v84 = vld [vmem:[#allocation6] ss:$4 sm:$0x3]
    %v86 = vperm.slane %v84, 0
    %v87 = vperm.slane %v84, 1
    %v90 = vmul.f32 %v86, %v78
    %v91 = vmul.f32 %v87, %v79
    %v92 = vmul.f32 %v86, %v80
    %v93 = vmul.f32 %v87, %v81
    %v94 = vld [vmem:[#allocation8] sm:$0x3]
    %v96 = vperm.slane %v94, 0
    %v97 = vperm.slane %v94, 1
    %v100 = vadd.f32 %v90, %v96
    %v101 = vadd.f32 %v91, %v97
    %v102 = vadd.f32 %v92, %v96
    %v103 = vadd.f32 %v93, %v97
    %s104 = scalar_lea.vmem [#allocation6], 1
    %v105 = vld [vmem:[%s104] ss:$4 sm:$0x3]
    %v107 = vperm.slane %v105, 0
    %v108 = vperm.slane %v105, 1
    %v111 = vmul.f32 %v107, %v78
    %v112 = vmul.f32 %v108, %v79
    %v113 = vmul.f32 %v107, %v80
    %v114 = vmul.f32 %v108, %v81
    %v115 = vmul.f32 %v107, %v82
    %v116 = vmul.f32 %v108, %v83
    %vm123 = vcmask 1046528
    %v124 = vrot.slane %v111, 1
    %v125 = vrot.slane %v113, 1
    %v126 = vsel %vm123, %v124, %v125
    %v127 = vrot.slane %v112, 1
    %v128 = vrot.slane %v114, 1
    %v129 = vsel %vm123, %v127, %v128
    %v130 = vrot.slane %v115, 1
    %v131 = vsel %vm123, %v125, %v130
    %v132 = vrot.slane %v116, 1
    %v133 = vsel %vm123, %v128, %v132
    %v138 = vadd.f32 %v100, %v126
    %v139 = vadd.f32 %v101, %v129
    %v140 = vadd.f32 %v102, %v131
    %v141 = vadd.f32 %v103, %v133
    %s142 = scalar_lea.vmem [#allocation6], 2
    %v143 = vld [vmem:[%s142] ss:$4 sm:$0x3]
    %v145 = vperm.slane %v143, 0
    %v146 = vperm.slane %v143, 1
    %v149 = vmul.f32 %v145, %v78
    %v150 = vmul.f32 %v146, %v79
    %v151 = vmul.f32 %v145, %v80
    %v152 = vmul.f32 %v146, %v81
    %v153 = vmul.f32 %v145, %v82
    %v154 = vmul.f32 %v146, %v83
    %vm161 = vcmask 1045504
    %v162 = vrot.slane %v149, 2
    %v163 = vrot.slane %v151, 2
    %v164 = vsel %vm161, %v162, %v163
    %v165 = vrot.slane %v150, 2
    %v166 = vrot.slane %v152, 2
    %v167 = vsel %vm161, %v165, %v166
    %v168 = vrot.slane %v153, 2
    %v169 = vsel %vm161, %v163, %v168
    %v170 = vrot.slane %v154, 2
    %v171 = vsel %vm161, %v166, %v170
    %v176 = vadd.f32 %v138, %v164
    %v177 = vadd.f32 %v139, %v167
    %v178 = vadd.f32 %v140, %v169
    %v179 = vadd.f32 %v141, %v171
    %vm180 = vcmp.ge.f32.partialorder %v176, 0.0
    %vm181 = vcmp.ge.f32.partialorder %v177, 0.0
    %vm182 = vcmp.ge.f32.partialorder %v178, 0.0
    %vm183 = vcmp.ge.f32.partialorder %v179, 0.0
    %v184 = vmul.f32 %v176, 0.1
    %v185 = vmul.f32 %v177, 0.1
    %v186 = vmul.f32 %v178, 0.1
    %v187 = vmul.f32 %v179, 0.1
    %v188 = vsel %vm180, %v176, %v184
    %v189 = vsel %vm181, %v177, %v185
    %v190 = vsel %vm182, %v178, %v186
    %v191 = vsel %vm183, %v179, %v187
    %vm196 = vcmask 1042432
    %v197 = vrot.slane %v188, 5
    %v198 = vrot.slane %v189, 5
    %v199 = vrot.slane %v190, 5
    %v200 = vsel %vm196, %v197, %v199
    %v201 = vrot.slane %v191, 5
    %v202 = vsel %vm196, %v198, %v201
    %v209 = vsel %vm196, 0.0, %v197
    %v210 = vsel %vm196, 0.0, %v198
    %v211 = vsel %vm196, %v199, 0.0
    %v212 = vsel %vm196, %v201, 0.0
    %213 = vst [vmem:[#allocation2] sm:$0xff] %v209
    %214 = vst [vmem:[#allocation2 + $0x8] sm:$0xff] %v210
    %215 = vst [vmem:[#allocation2 + $0x10] sm:$0xff] %v200
    %216 = vst [vmem:[#allocation2 + $0x18] sm:$0xff] %v202
    %217 = vst [vmem:[#allocation2 + $0x20] sm:$0xff] %v211
    %218 = vst [vmem:[#allocation2 + $0x28] sm:$0xff] %v212
    %v219 = vld [vmem:[#allocation9] ss:$8 sm:$0x3]
    %v220 = vld [vmem:[#allocation2] sm:$0xff]
    %v221 = vld [vmem:[#allocation2 + $0x8] sm:$0xff]
    %v222 = vld [vmem:[#allocation2 + $0x10] sm:$0xff]
    %v223 = vld [vmem:[#allocation2 + $0x18] sm:$0xff]
    %v225 = vperm.slane %v219, 0
    %v226 = vperm.slane %v219, 1
    %v229 = vmul.f32 %v225, %v220
    %v230 = vmul.f32 %v226, %v221
    %v231 = vmul.f32 %v225, %v222
    %v232 = vmul.f32 %v226, %v223
    %v233 = vld [vmem:[%s4] sm:$0x3]
    %v235 = vperm.slane %v233, 0
    %v236 = vperm.slane %v233, 1
    %v239 = vadd.f32 %v229, %v235
    %v240 = vadd.f32 %v230, %v236
    %v241 = vadd.f32 %v231, %v235
    %v242 = vadd.f32 %v232, %v236
    %s243 = scalar_lea.vmem [#allocation9], 1
    %v244 = vld [vmem:[%s243] ss:$8 sm:$0x3]
    %v245 = vld [vmem:[#allocation2] sm:$0xfe]
    %v246 = vld [vmem:[#allocation2 + $0x8] sm:$0xfe]
    %v247 = vld [vmem:[#allocation2 + $0x10] sm:$0xff]
    %v248 = vld [vmem:[#allocation2 + $0x18] sm:$0xff]
    %v249 = vld [vmem:[#allocation2 + $0x20] sm:$0x1]
    %v250 = vld [vmem:[#allocation2 + $0x28] sm:$0x1]
    %v252 = vperm.slane %v244, 0
    %v253 = vperm.slane %v244, 1
    %v256 = vmul.f32 %v252, %v245
    %v257 = vmul.f32 %v253, %v246
    %v258 = vmul.f32 %v252, %v247
    %v259 = vmul.f32 %v253, %v248
    %v260 = vmul.f32 %v252, %v249
    %v261 = vmul.f32 %v253, %v250
    %v268 = vrot.slane %v256, 1
    %v269 = vrot.slane %v258, 1
    %v270 = vsel %vm123, %v268, %v269
    %v271 = vrot.slane %v257, 1
    %v272 = vrot.slane %v259, 1
    %v273 = vsel %vm123, %v271, %v272
    %v274 = vrot.slane %v260, 1
    %v275 = vsel %vm123, %v269, %v274
    %v276 = vrot.slane %v261, 1
    %v277 = vsel %vm123, %v272, %v276
    %v282 = vadd.f32 %v239, %v270
    %v283 = vadd.f32 %v240, %v273
    %v284 = vadd.f32 %v241, %v275
    %v285 = vadd.f32 %v242, %v277
    %s286 = scalar_lea.vmem [#allocation9], 2
    %v287 = vld [vmem:[%s286] ss:$8 sm:$0x3]
    %v288 = vld [vmem:[#allocation2] sm:$0xfc]
    %v289 = vld [vmem:[#allocation2 + $0x8] sm:$0xfc]
    %v290 = vld [vmem:[#allocation2 + $0x20] sm:$0x3]
    %v291 = vld [vmem:[#allocation2 + $0x28] sm:$0x3]
    %v293 = vperm.slane %v287, 0
    %v294 = vperm.slane %v287, 1
    %v297 = vmul.f32 %v293, %v288
    %v298 = vmul.f32 %v294, %v289
    %v299 = vmul.f32 %v293, %v247
    %v300 = vmul.f32 %v294, %v248
    %v301 = vmul.f32 %v293, %v290
    %v302 = vmul.f32 %v294, %v291
    %v309 = vrot.slane %v297, 2
    %v310 = vrot.slane %v299, 2
    %v311 = vsel %vm161, %v309, %v310
    %v312 = vrot.slane %v298, 2
    %v313 = vrot.slane %v300, 2
    %v314 = vsel %vm161, %v312, %v313
    %v315 = vrot.slane %v301, 2
    %v316 = vsel %vm161, %v310, %v315
    %v317 = vrot.slane %v302, 2
    %v318 = vsel %vm161, %v313, %v317
    %v323 = vadd.f32 %v282, %v311
    %v324 = vadd.f32 %v283, %v314
    %v325 = vadd.f32 %v284, %v316
    %v326 = vadd.f32 %v285, %v318
    %s327 = scalar_lea.vmem [#allocation9], 3
    %v328 = vld [vmem:[%s327] ss:$8 sm:$0x3]
    %v329 = vld [vmem:[#allocation2] sm:$0xf8]
    %v330 = vld [vmem:[#allocation2 + $0x8] sm:$0xf8]
    %v331 = vld [vmem:[#allocation2 + $0x20] sm:$0x7]
    %v332 = vld [vmem:[#allocation2 + $0x28] sm:$0x7]
    %v334 = vperm.slane %v328, 0
    %v335 = vperm.slane %v328, 1
    %v338 = vmul.f32 %v334, %v329
    %v339 = vmul.f32 %v335, %v330
    %v340 = vmul.f32 %v334, %v247
    %v341 = vmul.f32 %v335, %v248
    %v342 = vmul.f32 %v334, %v331
    %v343 = vmul.f32 %v335, %v332
    %vm350 = vcmask 1044480
    %v351 = vrot.slane %v338, 3
    %v352 = vrot.slane %v340, 3
    %v353 = vsel %vm350, %v351, %v352
    %v354 = vrot.slane %v339, 3
    %v355 = vrot.slane %v341, 3
    %v356 = vsel %vm350, %v354, %v355
    %v357 = vrot.slane %v342, 3
    %v358 = vsel %vm350, %v352, %v357
    %v359 = vrot.slane %v343, 3
    %v360 = vsel %vm350, %v355, %v359
    %v365 = vadd.f32 %v323, %v353
    %v366 = vadd.f32 %v324, %v356
    %v367 = vadd.f32 %v325, %v358
    %v368 = vadd.f32 %v326, %v360
    %s369 = scalar_lea.vmem [#allocation9], 4
    %v370 = vld [vmem:[%s369] ss:$8 sm:$0x3]
    %v371 = vld [vmem:[#allocation2] sm:$0xf0]
    %v372 = vld [vmem:[#allocation2 + $0x8] sm:$0xf0]
    %v373 = vld [vmem:[#allocation2 + $0x20] sm:$0xf]
    %v374 = vld [vmem:[#allocation2 + $0x28] sm:$0xf]
    %v376 = vperm.slane %v370, 0
    %v377 = vperm.slane %v370, 1
    %v380 = vmul.f32 %v376, %v371
    %v381 = vmul.f32 %v377, %v372
    %v382 = vmul.f32 %v376, %v247
    %v383 = vmul.f32 %v377, %v248
    %v384 = vmul.f32 %v376, %v373
    %v385 = vmul.f32 %v377, %v374
    %vm392 = vcmask 1043456
    %v393 = vrot.slane %v380, 4
    %v394 = vrot.slane %v382, 4
    %v395 = vsel %vm392, %v393, %v394
    %v396 = vrot.slane %v381, 4
    %v397 = vrot.slane %v383, 4
    %v398 = vsel %vm392, %v396, %v397
    %v399 = vrot.slane %v384, 4
    %v400 = vsel %vm392, %v394, %v399
    %v401 = vrot.slane %v385, 4
    %v402 = vsel %vm392, %v397, %v401
    %v407 = vadd.f32 %v365, %v395
    %v408 = vadd.f32 %v366, %v398
    %v409 = vadd.f32 %v367, %v400
    %v410 = vadd.f32 %v368, %v402
    %s411 = scalar_lea.vmem [#allocation9], 5
    %v412 = vld [vmem:[%s411] ss:$8 sm:$0x3]
    %v413 = vld [vmem:[#allocation2] sm:$0xe0]
    %v414 = vld [vmem:[#allocation2 + $0x8] sm:$0xe0]
    %v415 = vld [vmem:[#allocation2 + $0x20] sm:$0x1f]
    %v416 = vld [vmem:[#allocation2 + $0x28] sm:$0x1f]
    %v418 = vperm.slane %v412, 0
    %v419 = vperm.slane %v412, 1
    %v422 = vmul.f32 %v418, %v413
    %v423 = vmul.f32 %v419, %v414
    %v424 = vmul.f32 %v418, %v247
    %v425 = vmul.f32 %v419, %v248
    %v426 = vmul.f32 %v418, %v415
    %v427 = vmul.f32 %v419, %v416
    %v434 = vrot.slane %v422, 5
    %v435 = vrot.slane %v424, 5
    %v436 = vsel %vm196, %v434, %v435
    %v437 = vrot.slane %v423, 5
    %v438 = vrot.slane %v425, 5
    %v439 = vsel %vm196, %v437, %v438
    %v440 = vrot.slane %v426, 5
    %v441 = vsel %vm196, %v435, %v440
    %v442 = vrot.slane %v427, 5
    %v443 = vsel %vm196, %v438, %v442
    %v448 = vadd.f32 %v407, %v436
    %v449 = vadd.f32 %v408, %v439
    %v450 = vadd.f32 %v409, %v441
    %v451 = vadd.f32 %v410, %v443
    %s452 = scalar_lea.vmem [#allocation9], 6
    %v453 = vld [vmem:[%s452] ss:$8 sm:$0x3]
    %v454 = vld [vmem:[#allocation2] sm:$0xc0]
    %v455 = vld [vmem:[#allocation2 + $0x8] sm:$0xc0]
    %v456 = vld [vmem:[#allocation2 + $0x20] sm:$0x3f]
    %v457 = vld [vmem:[#allocation2 + $0x28] sm:$0x3f]
    %v459 = vperm.slane %v453, 0
    %v460 = vperm.slane %v453, 1
    %v463 = vmul.f32 %v459, %v454
    %v464 = vmul.f32 %v460, %v455
    %v465 = vmul.f32 %v459, %v247
    %v466 = vmul.f32 %v460, %v248
    %v467 = vmul.f32 %v459, %v456
    %v468 = vmul.f32 %v460, %v457
    %vm475 = vcmask 1041408
    %v476 = vrot.slane %v463, 6
    %v477 = vrot.slane %v465, 6
    %v478 = vsel %vm475, %v476, %v477
    %v479 = vrot.slane %v464, 6
    %v480 = vrot.slane %v466, 6
    %v481 = vsel %vm475, %v479, %v480
    %v482 = vrot.slane %v467, 6
    %v483 = vsel %vm475, %v477, %v482
    %v484 = vrot.slane %v468, 6
    %v485 = vsel %vm475, %v480, %v484
    %v490 = vadd.f32 %v448, %v478
    %v491 = vadd.f32 %v449, %v481
    %v492 = vadd.f32 %v450, %v483
    %v493 = vadd.f32 %v451, %v485
    %494 = vst [vmem:[#allocation11] sm:$0xff] %v490
    %495 = vst [vmem:[#allocation11 + $0x8] sm:$0xff] %v491
    %496 = vst [vmem:[#allocation11 + $0x10] sm:$0xff] %v492
    %497 = vst [vmem:[#allocation11 + $0x18] sm:$0xff] %v493
    // Predicated region
    $region38: #{tpu_custom_call.1} parent=1 // pred_check
      _
    $region39: #{tpu_custom_call.1} parent=1 // pred_check_branch
      %499 = sbr.rel (0) target = $region41
    $region40: #{tpu_custom_call.1} parent=1 // pred_region
      %501 = vsyncadd [#allocation5], 0
      %s502 = sshll.u32 [#allocation11], 4
      %s503 = int_to_ptr.vmem [resolvable:$true] %s502
      %s504 = sshll.u32 %s5, 4
      %s505 = int_to_ptr.hbm [resolvable:$true] %s504
      %510 = dma.vmem_to_hbm [thread:$0]  %s503, 512, %s505, [#allocation5], 256, 256, 16
    $region41: #{tpu_custom_call.1} parent=1 // pred_fallthru
      _
    // Predicated region
    $region42: #{tpu_custom_call.1} parent=1 // pred_check
      _
    $region43: #{tpu_custom_call.1} parent=1 // pred_check_branch
      %512 = sbr.rel (0) target = $region45
    $region44: #{tpu_custom_call.1} parent=1 // pred_region
      %514 = dma.done [#allocation5], 512
    $region45: #{tpu_custom_call.1} parent=1 // pred_fallthru
      _
    %515 = vsyncpa [#allocation4], 1
    %516 = vsyncpa [#allocation7], 1
    %517 = vsyncpa [#allocation10], 1
    %518 = vsyncpa [#allocation5], 1

</llo_original>
